<compile_context>
chip_gen: v7x
topology: tpu7x:2x2x1
jax: 0.10.0
libtpu: 0.0.40
codegen_flags: <defaults>
</compile_context>

<pallas_src>
import jax
import jax.numpy as jnp
from jax.experimental import pallas as pl
from jax.experimental.pallas import tpu as pltpu


def _round_up(x, m):
    return ((x + m - 1) // m) * m


def _trim_kernel(x_ref, o_ref):
    # x_ref: (c_blk, h_blk, w_blk) tiling-padded input window
    # o_ref: (c_blk, out_h, out_w) output crop
    _, out_h, out_w = o_ref.shape
    o_ref[...] = x_ref[:, :out_h, :out_w]


def trim(x, crop_h=50, crop_w=50):
    """Pallas equivalent of x[:, :, :crop_h, :crop_w] (NCHW)."""
    n, c, h, w = x.shape
    out_h = min(crop_h, h)
    out_w = min(crop_w, w)

    itemsize = jnp.dtype(x.dtype).itemsize
    # Native sublane packing: 8 rows for 4-byte dtypes, 16 for 2-byte, 32 for 1-byte.
    sublane = max(8, 32 // max(1, itemsize))

    # Only DMA the crop window, rounded up to the (sublane, 128) tiling.
    # If rounding exceeds the array dim, fall back to the full dim (always legal).
    h_blk = min(h, _round_up(out_h, sublane))
    w_blk = min(w, _round_up(out_w, 128))

    # Block multiple channels per grid step: large per-step payload + one big
    # contiguous output DMA instead of many short 50-wide strided rows.
    bytes_per_channel = (h_blk * w_blk + out_h * out_w) * itemsize
    # ~4 MiB per buffer set -> ~8 MiB double-buffered (in + out): comfortably
    # under the default scoped-VMEM limit on v5e (16 MiB) and v6e/v7x (32 MiB).
    vmem_budget = 4 * 1024 * 1024
    max_c_blk = max(1, vmem_budget // bytes_per_channel)
    c_blk = 1
    for d in range(1, c + 1):
        if c % d == 0 and d <= max_c_blk:
            c_blk = d

    # Keep >=2 parallel grid steps so v7x can split work across its 2 TensorCores.
    if n * (c // c_blk) < 2 and c_blk > 1:
        for d in range(c_blk - 1, 0, -1):
            if c % d == 0:
                c_blk = d
                break

    grid = (n, c // c_blk)

    in_spec = pl.BlockSpec(
        (None, c_blk, h_blk, w_blk),   # N squeezed; crop-window block of c_blk planes
        lambda i, j: (i, j, 0, 0),
    )
    out_spec = pl.BlockSpec(
        (None, c_blk, out_h, out_w),   # full output plane (50x50) per channel block
        lambda i, j: (i, j, 0, 0),
    )

    return pl.pallas_call(
        _trim_kernel,
        out_shape=jax.ShapeDtypeStruct((n, c, out_h, out_w), x.dtype),
        grid_spec=pltpu.PrefetchScalarGridSpec(
            num_scalar_prefetch=0,
            grid=grid,
            in_specs=[in_spec],
            out_specs=out_spec,
        ),
        compiler_params=pltpu.CompilerParams(
            dimension_semantics=("parallel", "parallel"),
        ),
    )(x)


if __name__ == "__main__":
    key = jax.random.PRNGKey(0)

    # Primary case: spatial dims > 50 so the trim is non-trivial.
    x = jax.random.normal(key, (2, 4, 64, 64), dtype=jnp.float32)
    out = trim(x)
    jax.block_until_ready(out)
    ref = x[:, :, :50, :50]
    assert out.shape == (2, 4, 50, 50), out.shape
    assert out.dtype == x.dtype
    assert jnp.array_equal(out, ref), "mismatch vs reference slice (64x64 f32)"

    # Wide case: exercises the w > 128 path (input block = 56x128 window only)
    # and multi-channel blocking per grid step.
    x2 = jax.random.normal(jax.random.PRNGKey(0), (2, 8, 160, 160), dtype=jnp.float32)
    out2 = trim(x2)
    jax.block_until_ready(out2)
    assert jnp.array_equal(out2, x2[:, :, :50, :50]), "mismatch (160x160 f32)"

    # bf16 case: exercises the 16-row sublane rounding and the >=2-step fallback.
    x3 = jax.random.normal(jax.random.PRNGKey(0), (1, 4, 64, 64)).astype(jnp.bfloat16)
    out3 = trim(x3)
    jax.block_until_ready(out3)
    assert jnp.array_equal(out3, x3[:, :, :50, :50]), "mismatch (64x64 bf16)"

    print("KERNEL_OK")
</pallas_src>

<mosaic_0001>
module attributes {stable_mosaic.version = 11 : i64} {
  func.func @_trim_kernel(%arg0: i32, %arg1: i32, %arg2: memref<1x4x56x64xf32, #tpu.memory_space<vmem>>, %arg3: memref<1x4x50x50xf32, #tpu.memory_space<vmem>>) attributes {dimension_semantics = [#tpu.dimension_semantics<parallel>, #tpu.dimension_semantics<parallel>], iteration_bounds = array<i64: 2, 1>, scalar_prefetch = 0 : i64, scratch_operands = 0 : i64, tpu.core_type = #tpu.core_type<tc>, window_params = [{transform_indices = @transform_0, window_bounds = array<i64: 1, 4, 56, 64>}, {transform_indices = @transform_1, window_bounds = array<i64: 1, 4, 50, 50>}]} {
    %c0 = arith.constant 0 : index
    %c0_0 = arith.constant 0 : index
    %c0_1 = arith.constant 0 : index
    %c0_2 = arith.constant 0 : index
    %0 = vector.load %arg2[%c0, %c0_0, %c0_1, %c0_2] : memref<1x4x56x64xf32, #tpu.memory_space<vmem>>, vector<1x4x50x50xf32>
    %1 = vector.shape_cast %0 : vector<1x4x50x50xf32> to vector<4x50x50xf32>
    %c0_3 = arith.constant 0 : index
    %c0_4 = arith.constant 0 : index
    %c0_5 = arith.constant 0 : index
    %c0_6 = arith.constant 0 : index
    %2 = vector.load %arg3[%c0_3, %c0_4, %c0_5, %c0_6] : memref<1x4x50x50xf32, #tpu.memory_space<vmem>>, vector<1x4x50x50xf32>
    %3 = vector.shape_cast %2 : vector<1x4x50x50xf32> to vector<4x50x50xf32>
    %4 = vector.shape_cast %1 : vector<4x50x50xf32> to vector<1x4x50x50xf32>
    tpu.vector_store %arg3[%c0_3, %c0_4, %c0_5, %c0_6], %4 {strides = array<i32>} : memref<1x4x50x50xf32, #tpu.memory_space<vmem>>, vector<1x4x50x50xf32>,
    return
  }
  func.func @transform_0(%arg0: i32, %arg1: i32) -> (i32, i32, i32, i32) {
    %c0_i32 = arith.constant 0 : i32
    %c0_i32_0 = arith.constant 0 : i32
    %c0_i32_1 = arith.constant 0 : i32
    return %arg0, %arg1, %c0_i32, %c0_i32_0 : i32, i32, i32, i32
  }
  func.func @transform_1(%arg0: i32, %arg1: i32) -> (i32, i32, i32, i32) {
    %c0_i32 = arith.constant 0 : i32
    %c0_i32_0 = arith.constant 0 : i32
    %c0_i32_1 = arith.constant 0 : i32
    return %arg0, %arg1, %c0_i32, %c0_i32_0 : i32, i32, i32, i32
  }
}

</mosaic_0001>

<llo_original>
// kernel: tpu_custom_call.1
$region0: #{tpu_custom_call.1}
  #allocation0 [shape = 'u32[]', space=smem, size = 0x4, offset = 0x4, fixed_abs, tag = 'smem constant byte address 0x4 - core index']
  #allocation1 [shape = 'u32[144,128]{1,0:T(1,128)}', space=vmem, size = 0x12000, scoped, tag = 'internal scratch']
  #allocation4 [shape = 's32[]', space=sflag, size = 0x4, offset = 0, fixed_abs, tag = 'sflag constant byte address 0x0 - dummy sync flag']
  %s0 = inlined_call_operand.hbm [shape: f32[2,4,64,64], index: 0, kind: input, shape index: {}]
  %s1 = inlined_call_operand.vmem [shape: f32[2,4,50,50], index: 1, kind: output, shape index: {}]
  %s2 = sld [smem:[#allocation0]]
  $region41: #{tpu_custom_call.1} parent=0
    _
  %s4 = ssub.s32 1, %s2
  %s5 = scalar_select 0, %s4, %s2
  $region1: #{tpu_custom_call.1} parent=0
    #allocation2 [shape = 'u8[229376]{0}', space=vmem, size = 0x38000, scoped, tag = 'input window, operand 0']
    #allocation3 [shape = 's32[2]{0}', space=sflag, size = 0x8, scoped, tag = 'scoped memory for tpu_custom_call.1']
    %6 = vsyncpa [#allocation3], 0
    %s7 = scalar_lea.sflag [#allocation3], 1
    %8 = vsyncpa %s7, 0
    loop: start=0, step=1, limit=4
    $region2: #{tpu_custom_call.1} parent=1 // loop_pre_header
      _
    $region3: #{tpu_custom_call.1} parent=1 // loop_header
      %s10 = sphi 0, %s14
      %p11 = scmp.ge.s32.totalorder %s10, 4
      %s17 = sphi 0, %s29
      %s18 = sphi 0, %s25
      %s19 = sphi 0, %s17
      %s20 = sphi 0, %s18
      %s21 = sphi 0, %s19
      %s22 = sphi 0, %s20
      %s34 = sphi 0, %s36
      %s37 = sphi 0, %s34
      %s38 = sphi 0, %s37
      %s54 = sphi 0, %s38
      %s62 = sphi 0, %s64
      %s65 = sphi 0, %s62
      %s66 = sphi 0, %s65
      %s82 = sphi 0, %s66
    $region4: #{tpu_custom_call.1} parent=1 // loop_header_branch
      %13 = sbr.rel (%p11) target = $region8
    $region5: #{tpu_custom_call.1} parent=1 // loop_body
      %s15 = ssub.s32 %s10, 1
      %s16 = ssub.s32 %s10, 2
      %s23 = sadd.s32 1, %s18
      %p24 = scmp.ge.s32.totalorder %s23, 1
      %s25 = scalar_select %p24, 0, %s23
      %s26 = sadd.s32 1, %s17
      %s27 = scalar_select %p24, %s26, %s17
      %p28 = scmp.ge.s32.totalorder %s27, 2
      %s29 = scalar_select %p28, 0, %s27
      %s30 = ssub.s32 %s17, %s29
      %s31 = ssub.s32 %s18, %s25
      %s32 = sor.u32 %s30, %s31
      %p33 = scmp.eq.s32.totalorder %s32, 0
      %s35 = sadd.s32 %s34, 1
      %s36 = scalar_select %p33, %s34, %s35
      %p39 = pneg %p33
      %p40 = scmp.eq.s32.totalorder %s10, 1
      %p41 = por %p39, %p40
      %p42 = scmp.ne.s32.totalorder %s34, %s37
      %p43 = scmp.eq.s32.totalorder %s10, 0
      %p44 = por %p42, %p43
      %p45 = scmp.ne.s32.totalorder %s34, %s37
      %p46 = scmp.eq.s32.totalorder %s15, 1
      %p47 = por %p45, %p46
      %p48 = scmp.ne.s32.totalorder %s37, %s38
      %p49 = scmp.eq.s32.totalorder %s15, 0
      %p50 = por %p48, %p49
      %p51 = scmp.ne.s32.totalorder %s37, %s38
      %p52 = scmp.eq.s32.totalorder %s16, 1
      %p53 = por %p51, %p52
      %p55 = scmp.ne.s32.totalorder %s38, %s54
      %p56 = scmp.eq.s32.totalorder %s16, 0
      %p57 = por %p55, %p56
      %s58 = ssub.s32 %s17, %s29
      %s59 = ssub.s32 %s18, %s25
      %s60 = sor.u32 %s58, %s59
      %p61 = scmp.eq.s32.totalorder %s60, 0
      %s63 = sadd.s32 %s62, 1
      %s64 = scalar_select %p61, %s62, %s63
      %p67 = pneg %p61
      %p68 = scmp.eq.s32.totalorder %s10, 1
      %p69 = por %p67, %p68
      %p70 = scmp.ne.s32.totalorder %s62, %s65
      %p71 = scmp.eq.s32.totalorder %s10, 0
      %p72 = por %p70, %p71
      %p73 = scmp.ne.s32.totalorder %s62, %s65
      %p74 = scmp.eq.s32.totalorder %s15, 1
      %p75 = por %p73, %p74
      %p76 = scmp.ne.s32.totalorder %s65, %s66
      %p77 = scmp.eq.s32.totalorder %s15, 0
      %p78 = por %p76, %p77
      %p79 = scmp.ne.s32.totalorder %s65, %s66
      %p80 = scmp.eq.s32.totalorder %s16, 1
      %p81 = por %p79, %p80
      %p83 = scmp.ne.s32.totalorder %s66, %s82
      %p84 = scmp.eq.s32.totalorder %s16, 0
      %p85 = por %p83, %p84
      %p86 = scmp.le.s32.totalorder 1, %s10
      %p87 = scmp.lt.s32.totalorder %s10, 3
      %p88 = pnand %p86, %p87
      %p89 = pneg %p88
      // Predicated region
      $region9: #{tpu_custom_call.1} parent=5 // pred_check
        _
      $region10: #{tpu_custom_call.1} parent=5 // pred_check_branch
        %91 = sbr.rel (%p88) target = $region12
      $region11: #{tpu_custom_call.1} parent=5 // pred_region
        %s92 = ssub.s32 %s10, 1
      $region12: #{tpu_custom_call.1} parent=5 // pred_fallthru
        _
      %p93 = scmp.lt.s32.totalorder %s10, 2
      // Predicated region
      $region13: #{tpu_custom_call.1} parent=5 // pred_check
        %p94 = pneg %p93
      $region14: #{tpu_custom_call.1} parent=5 // pred_check_branch
        %96 = sbr.rel (%p94) target = $region16
      $region15: #{tpu_custom_call.1} parent=5 // pred_region
        // Predicated region
        $region17: #{tpu_custom_call.1} parent=15 // pred_check
          %p97 = pneg %p44
        $region18: #{tpu_custom_call.1} parent=15 // pred_check_branch
          %99 = sbr.rel (%p97) target = $region20
        $region19: #{tpu_custom_call.1} parent=15 // pred_region
          #allocation5 [shape = 'u32[6]{0}', space=smem, size = 0x18, scoped, tag = 'DMA stride descriptor']
          %s100 = sand.u32 %s34, 1
          %s101 = scalar_lea.sflag [#allocation3], %s100
          %s102 = sand.u32 %s34, 1
          %s103 = smul.addr %s102, 224
          %s104 = scalar_lea.vmem [#allocation2], %s103
          %s105 = smul.u32 4, %s18
          %s107 = ssub.s32 3584, 3584
          %108 = vsyncadd %s101, %s107
          %s109 = smul.addr %s105, 8
          %s110 = smul.addr %s17, 32
          %s111 = sadd.s32 %s109, %s110
          %s112 = smul.addr %s111, 128
          %s113 = scalar_lea.hbm %s0, %s112
          %s115 = sshll.u32 1, 14
          %s116 = sxor.u32 4294967295, %s115
          %s118 = sld [smem:[#allocation0]]
          %s119 = sadd.s32 2, %s118
          %s121 = sshll.u32 7, 26
          %s122 = sxor.u32 4294967295, %s121
          %s123 = sand.u32 0, %s122
          %s124 = sshll.u32 %s119, 26
          %s125 = sor.u32 %s123, %s124
          %s126 = sshll.u32 %s104, 4
          %s127 = int_to_ptr.vmem [resolvable:$true] %s126
          %133 = sst [smem:[#allocation5]] 1024
          %s134 = scalar_lea.smem [#allocation5], 1
          %135 = sst [smem:[%s134]] 896
          %s136 = scalar_lea.smem [#allocation5], 2
          %137 = sst [smem:[%s136]] 7
          %s138 = scalar_lea.smem [#allocation5], 3
          %139 = sst [smem:[%s138]] 128
          %s140 = scalar_lea.smem [#allocation5], 4
          %141 = sst [smem:[%s140]] 128
          %s142 = scalar_lea.smem [#allocation5], 5
          %143 = sst [smem:[%s142]] 8
          %145 = dma.general %s113, 3584, %s127, %s101, [#allocation4], [#allocation5], %s125, 0
        $region20: #{tpu_custom_call.1} parent=15 // pred_fallthru
          _
      $region16: #{tpu_custom_call.1} parent=5 // pred_fallthru
        _
      %p146 = scmp.le.s32.totalorder 1, %s10
      %p147 = scmp.lt.s32.totalorder %s10, 3
      %p148 = pnand %p146, %p147
      %p149 = pneg %p148
      // Predicated region
      $region21: #{tpu_custom_call.1} parent=5 // pred_check
        _
      $region22: #{tpu_custom_call.1} parent=5 // pred_check_branch
        %151 = sbr.rel (%p148) target = $region24
      $region23: #{tpu_custom_call.1} parent=5 // pred_region
        %s152 = ssub.s32 %s10, 1
        %s153 = sand.u32 %s37, 1
        %s154 = scalar_lea.sflag [#allocation3], %s153
        %s155 = sand.u32 %s37, 1
        %s156 = smul.addr %s155, 224
        %s157 = scalar_lea.vmem [#allocation2], %s156
        // Predicated region
        $region25: #{tpu_custom_call.1} parent=23 // pred_check
          %p158 = pneg %p50
        $region26: #{tpu_custom_call.1} parent=23 // pred_check_branch
          %160 = sbr.rel (%p158) target = $region28
        $region27: #{tpu_custom_call.1} parent=23 // pred_region
          %161 = dma.done %s154, 3584
        $region28: #{tpu_custom_call.1} parent=23 // pred_fallthru
          _
        %s162 = sand.u32 %s37, 1
        %s163 = scalar_lea.sflag [#allocation3], %s162
        %s164 = sand.u32 %s37, 1
        %s165 = smul.addr %s164, 224
        %s166 = scalar_lea.vmem [#allocation2], %s165
        %p167 = pneg %p50
        %p168 = pneg %p47
        %p169 = pneg %p78
        %p170 = pneg %p75
        %s171 = smul.u32 4, %s20
        %p172 = scmp.lt.s32.totalorder %s19, 1
        %s173 = scalar_select %p172, %s19, 1
        %p174 = scmp.lt.s32.totalorder %s171, 3
        %s175 = scalar_select %p174, %s171, 3
        %s176 = smul.addr %s175, 7
        %s177 = smul.addr %s173, 28
        %s178 = sadd.s32 %s176, %s177
        %s179 = smul.addr %s178, 8
        %s180 = scalar_lea.vmem %s1, %s179
        %s181 = smul.u32 4, %s20
        %s182 = smul.u32 4, %s20
        %p183 = scmp.lt.s32.totalorder %s19, 1
        %s184 = scalar_select %p183, %s19, 1
        %p185 = scmp.lt.s32.totalorder %s182, 3
        %s186 = scalar_select %p185, %s182, 3
        %s187 = smul.addr %s186, 7
        %s188 = smul.addr %s184, 28
        %s189 = sadd.s32 %s187, %s188
        %s190 = smul.addr %s189, 8
        %s191 = scalar_lea.vmem %s1, %s190
        %s192 = smul.u32 4, %s20
        %v193 = vld [vmem:[%s157] sm:$0xff]
        %v194 = vld [vmem:[%s157 + $0x8] sm:$0xff]
        %v195 = vld [vmem:[%s157 + $0x10] sm:$0xff]
        %v196 = vld [vmem:[%s157 + $0x18] sm:$0xff]
        %v197 = vld [vmem:[%s157 + $0x20] sm:$0xff]
        %v198 = vld [vmem:[%s157 + $0x28] sm:$0xff]
        %v199 = vld [vmem:[%s157 + $0x30] sm:$0x3]
        %v200 = vld [vmem:[%s157 + $0x38] sm:$0xff]
        %v201 = vld [vmem:[%s157 + $0x40] sm:$0xff]
        %v202 = vld [vmem:[%s157 + $0x48] sm:$0xff]
        %v203 = vld [vmem:[%s157 + $0x50] sm:$0xff]
        %v204 = vld [vmem:[%s157 + $0x58] sm:$0xff]
        %v205 = vld [vmem:[%s157 + $0x60] sm:$0xff]
        %v206 = vld [vmem:[%s157 + $0x68] sm:$0x3]
        %v207 = vld [vmem:[%s157 + $0x70] sm:$0xff]
        %v208 = vld [vmem:[%s157 + $0x78] sm:$0xff]
        %v209 = vld [vmem:[%s157 + $0x80] sm:$0xff]
        %v210 = vld [vmem:[%s157 + $0x88] sm:$0xff]
        %v211 = vld [vmem:[%s157 + $0x90] sm:$0xff]
        %v212 = vld [vmem:[%s157 + $0x98] sm:$0xff]
        %v213 = vld [vmem:[%s157 + $0xa0] sm:$0x3]
        %v214 = vld [vmem:[%s157 + $0xa8] sm:$0xff]
        %v215 = vld [vmem:[%s157 + $0xb0] sm:$0xff]
        %v216 = vld [vmem:[%s157 + $0xb8] sm:$0xff]
        %v217 = vld [vmem:[%s157 + $0xc0] sm:$0xff]
        %v218 = vld [vmem:[%s157 + $0xc8] sm:$0xff]
        %v219 = vld [vmem:[%s157 + $0xd0] sm:$0xff]
        %v220 = vld [vmem:[%s157 + $0xd8] sm:$0x3]
        %vm221 = vcmask 408576
        %222 = vst.msk [vmem:[%s191] sm:$0xff] %vm221, %v193
        %223 = vst.msk [vmem:[%s191 + $0x8] sm:$0xff] %vm221, %v194
        %224 = vst.msk [vmem:[%s191 + $0x10] sm:$0xff] %vm221, %v195
        %225 = vst.msk [vmem:[%s191 + $0x18] sm:$0xff] %vm221, %v196
        %226 = vst.msk [vmem:[%s191 + $0x20] sm:$0xff] %vm221, %v197
        %227 = vst.msk [vmem:[%s191 + $0x28] sm:$0xff] %vm221, %v198
        %vm228 = vcmask 402432
        %229 = vst.msk [vmem:[%s191 + $0x30] sm:$0x3] %vm228, %v199
        %230 = vst.msk [vmem:[%s191 + $0x38] sm:$0xff] %vm221, %v200
        %231 = vst.msk [vmem:[%s191 + $0x40] sm:$0xff] %vm221, %v201
        %232 = vst.msk [vmem:[%s191 + $0x48] sm:$0xff] %vm221, %v202
        %233 = vst.msk [vmem:[%s191 + $0x50] sm:$0xff] %vm221, %v203
        %234 = vst.msk [vmem:[%s191 + $0x58] sm:$0xff] %vm221, %v204
        %235 = vst.msk [vmem:[%s191 + $0x60] sm:$0xff] %vm221, %v205
        %236 = vst.msk [vmem:[%s191 + $0x68] sm:$0x3] %vm228, %v206
        %237 = vst.msk [vmem:[%s191 + $0x70] sm:$0xff] %vm221, %v207
        %238 = vst.msk [vmem:[%s191 + $0x78] sm:$0xff] %vm221, %v208
        %239 = vst.msk [vmem:[%s191 + $0x80] sm:$0xff] %vm221, %v209
        %240 = vst.msk [vmem:[%s191 + $0x88] sm:$0xff] %vm221, %v210
        %241 = vst.msk [vmem:[%s191 + $0x90] sm:$0xff] %vm221, %v211
        %242 = vst.msk [vmem:[%s191 + $0x98] sm:$0xff] %vm221, %v212
        %243 = vst.msk [vmem:[%s191 + $0xa0] sm:$0x3] %vm228, %v213
        %244 = vst.msk [vmem:[%s191 + $0xa8] sm:$0xff] %vm221, %v214
        %245 = vst.msk [vmem:[%s191 + $0xb0] sm:$0xff] %vm221, %v215
        %246 = vst.msk [vmem:[%s191 + $0xb8] sm:$0xff] %vm221, %v216
        %247 = vst.msk [vmem:[%s191 + $0xc0] sm:$0xff] %vm221, %v217
        %248 = vst.msk [vmem:[%s191 + $0xc8] sm:$0xff] %vm221, %v218
        %249 = vst.msk [vmem:[%s191 + $0xd0] sm:$0xff] %vm221, %v219
        %250 = vst.msk [vmem:[%s191 + $0xd8] sm:$0x3] %vm228, %v220
        %s251 = smul.u32 4, %s20
        %p252 = scmp.lt.s32.totalorder %s19, 1
        %s253 = scalar_select %p252, %s19, 1
        %p254 = scmp.lt.s32.totalorder %s251, 3
        %s255 = scalar_select %p254, %s251, 3
        %s256 = smul.addr %s255, 7
        %s257 = smul.addr %s253, 28
        %s258 = sadd.s32 %s256, %s257
        %s259 = smul.addr %s258, 8
        %s260 = scalar_lea.vmem %s1, %s259
        // Predicated region
        $region29: #{tpu_custom_call.1} parent=23 // pred_check
          %p261 = pneg %p75
        $region30: #{tpu_custom_call.1} parent=23 // pred_check_branch
          %263 = sbr.rel (%p261) target = $region32
        $region31: #{tpu_custom_call.1} parent=23 // pred_region
          %s264 = smul.u32 4, %s20
        $region32: #{tpu_custom_call.1} parent=23 // pred_fallthru
          _
      $region24: #{tpu_custom_call.1} parent=5 // pred_fallthru
        _
      %p265 = scmp.le.s32.totalorder 2, %s10
      // Predicated region
      $region33: #{tpu_custom_call.1} parent=5 // pred_check
        %p266 = pneg %p265
      $region34: #{tpu_custom_call.1} parent=5 // pred_check_branch
        %268 = sbr.rel (%p266) target = $region36
      $region35: #{tpu_custom_call.1} parent=5 // pred_region
        %s269 = ssub.s32 %s10, 2
        // Predicated region
        $region37: #{tpu_custom_call.1} parent=35 // pred_check
          %p270 = pneg %p81
        $region38: #{tpu_custom_call.1} parent=35 // pred_check_branch
          %272 = sbr.rel (%p270) target = $region40
        $region39: #{tpu_custom_call.1} parent=35 // pred_region
          %s273 = smul.u32 4, %s22
          %p274 = scmp.lt.s32.totalorder %s21, 1
          %s275 = scalar_select %p274, %s21, 1
          %p276 = scmp.lt.s32.totalorder %s273, 3
          %s277 = scalar_select %p276, %s273, 3
          %s278 = smul.addr %s277, 7
          %s279 = smul.addr %s275, 28
          %s280 = sadd.s32 %s278, %s279
          %s281 = smul.addr %s280, 8
          %s282 = scalar_lea.vmem %s1, %s281
        $region40: #{tpu_custom_call.1} parent=35 // pred_fallthru
          _
      $region36: #{tpu_custom_call.1} parent=5 // pred_fallthru
        _
    $region6: #{tpu_custom_call.1} parent=1 // loop_footer
      %s14 = sadd.s32 1, %s10
    $region7: #{tpu_custom_call.1} parent=1 // loop_footer_branch
      %9 = sbr.rel target = $region3
    $region8: #{tpu_custom_call.1} parent=1 // loop_exit
      _
    %283 = vsyncpa [#allocation3], 1
    %s284 = scalar_lea.sflag [#allocation3], 1
    %285 = vsyncpa %s284, 1

</llo_original>
